<compile_context>
chip_gen: v5e
topology: v5e:2x2
jax: 0.10.0
libtpu: 0.0.40
codegen_flags: <defaults>
</compile_context>

<pallas_src>
import math

import jax
import jax.numpy as jnp
from jax import lax
from jax.experimental import pallas as pl
from jax.experimental.pallas import tpu as pltpu


def _conv1d_im2col_kernel(xcol_ref, w_ref, b_ref, o_ref):
    """One (batch, L-tile) grid step: a single MXU matmul + bias add.

    xcol_ref: (1, K*C_in, TILE_L)  im2col'd input tile, L on the lane axis
    w_ref:    (C_out, K*C_in)      folded conv weight (constant across grid)
    b_ref:    (C_out, 1)           bias column
    o_ref:    (1, C_out, TILE_L)   NCL output tile (lane-dense on L)
    """
    acc = jnp.dot(w_ref[...], xcol_ref[0],
                  preferred_element_type=jnp.float32)      # (C_out, TILE_L)
    acc = acc + b_ref[...].astype(jnp.float32)
    o_ref[0] = acc.astype(o_ref.dtype)


def conv1d_synapse_conn_forward(x, weight, bias=None, *, stride=1, padding=0,
                                dilation=1, tile_l=None):
    """Pallas implementation of Conv1dSynapseConn.single_step_forward.

    x:      (N, C_in, L)      PyTorch NCL layout
    weight: (C_out, C_in, K)  nn.Conv1d weight layout
    bias:   (C_out,) or None
    returns (N, C_out, L_out) in NCL layout
    """
    N, C_in, L = x.shape
    C_out, C_in_w, K = weight.shape
    if C_in_w != C_in:
        raise NotImplementedError("groups != 1 is not supported")
    if not isinstance(padding, int):
        raise NotImplementedError("string padding modes not supported")

    L_out = (L + 2 * padding - dilation * (K - 1) - 1) // stride + 1
    if L_out < 1:
        raise ValueError("non-positive output length")

    # --- wrapper prep (no layout transposes of x or y) -----------------------
    if padding > 0:
        x = jnp.pad(x, ((0, 0), (0, 0), (padding, padding)))  # 'zeros' padding

    # im2col: x_col[n, k*C_in + ci, l] = x_pad[n, ci, l*stride + k*dilation].
    # This folds the K taps into one contraction dim and resolves stride /
    # dilation outside the kernel (contiguous lane loads in-kernel).
    cols = []
    for k in range(K):
        start = k * dilation
        limit = start + (L_out - 1) * stride + 1
        cols.append(lax.slice(x, (0, 0, start), (N, C_in, limit),
                              (1, 1, stride)))               # (N, C_in, L_out)
    x_col = cols[0] if K == 1 else jnp.concatenate(cols, axis=1)
    R = K * C_in                                             # contraction dim

    # Weight folded to (C_out, K*C_in), matching r = k*C_in + ci ordering.
    w2 = jnp.transpose(weight, (0, 2, 1)).reshape(C_out, R)
    if bias is None:
        b2 = jnp.zeros((C_out, 1), dtype=x.dtype)
    else:
        b2 = bias.reshape(C_out, 1).astype(x.dtype)

    # --- L tiling ------------------------------------------------------------
    # Full-extent block when L_out is small; otherwise a 128-aligned tile
    # (<=1024) so the (8,128) rule holds, stores stay lane-dense, and VMEM per
    # buffer stays well under the v7x scoped limit.
    if tile_l is None or tile_l >= L_out:
        tile_l = min(L_out, 1024)
    if tile_l != L_out:
        tile_l = max(128, (tile_l // 128) * 128)
        if tile_l >= L_out:
            tile_l = L_out
    n_l_tiles = pl.cdiv(L_out, tile_l)

    out = pl.pallas_call(
        _conv1d_im2col_kernel,
        out_shape=jax.ShapeDtypeStruct((N, C_out, L_out), x.dtype),
        grid=(N, n_l_tiles),
        in_specs=[
            pl.BlockSpec((1, R, tile_l), lambda n, j: (n, 0, j)),
            pl.BlockSpec((C_out, R), lambda n, j: (0, 0)),
            pl.BlockSpec((C_out, 1), lambda n, j: (0, 0)),
        ],
        out_specs=pl.BlockSpec((1, C_out, tile_l), lambda n, j: (n, 0, j)),
        compiler_params=pltpu.CompilerParams(
            dimension_semantics=("parallel", "parallel"),
            vmem_limit_bytes=32 * 1024 * 1024),
    )(x_col, w2, b2)

    return out                                               # (N, C_out, L_out)


def conv1d_synapse_conn_forward_multi_step(x_seq, weight, bias=None, **kw):
    """multi_step_forward (step_mode='m'): same conv applied per time step.

    x_seq: (T, N, C_in, L) -> (T, N, C_out, L_out). Time is folded into the
    batch axis (equivalent to unfold_forward_fold), so one kernel launch
    covers all steps.
    """
    T, N = x_seq.shape[0], x_seq.shape[1]
    y = conv1d_synapse_conn_forward(
        x_seq.reshape((T * N,) + x_seq.shape[2:]), weight, bias, **kw)
    return y.reshape((T, N) + y.shape[1:])


def init_conv1d_params(key, in_channels, out_channels, kernel_size):
    """Deterministic nn.Conv1d-style init (kaiming-uniform a=sqrt(5))."""
    k_w, k_b = jax.random.split(key)
    fan_in = in_channels * kernel_size
    bound_w = math.sqrt(1.0 / fan_in)            # gain*sqrt(3/fan_in), a=sqrt(5)
    weight = jax.random.uniform(
        k_w, (out_channels, in_channels, kernel_size),
        minval=-bound_w, maxval=bound_w, dtype=jnp.float32)
    bound_b = 1.0 / math.sqrt(fan_in)
    bias = jax.random.uniform(
        k_b, (out_channels,), minval=-bound_b, maxval=bound_b,
        dtype=jnp.float32)
    return weight, bias


def _reference_conv1d(x, weight, bias, *, stride, padding, dilation):
    y = lax.conv_general_dilated(
        x, weight,
        window_strides=(stride,),
        padding=[(padding, padding)],
        rhs_dilation=(dilation,),
        dimension_numbers=("NCH", "OIH", "NCH"),
    )
    if bias is not None:
        y = y + bias[None, :, None]
    return y


if __name__ == "__main__":
    key = jax.random.PRNGKey(0)
    k_x1, k_p1, k_x2, k_p2, k_x3, k_p3 = jax.random.split(key, 6)

    # --- Test 1: module-sized demo (single-step, defaults) -------------------
    N, C_in, C_out, L, K = 2, 4, 8, 16, 3
    x1 = jax.random.normal(k_x1, (N, C_in, L), dtype=jnp.float32)
    w1, b1 = init_conv1d_params(k_p1, C_in, C_out, K)
    y1 = conv1d_synapse_conn_forward(x1, w1, b1, stride=1, padding=1,
                                     dilation=1)
    y1 = jax.block_until_ready(y1)
    y1_ref = _reference_conv1d(x1, w1, b1, stride=1, padding=1, dilation=1)
    assert y1.shape == y1_ref.shape, (y1.shape, y1_ref.shape)
    assert jnp.allclose(y1, y1_ref, atol=1e-5, rtol=1e-5), "test1 mismatch"

    # --- Test 2: stride / dilation / no bias ---------------------------------
    N2, C_in2, C_out2, L2, K2 = 1, 3, 5, 33, 5
    x2 = jax.random.normal(k_x2, (N2, C_in2, L2), dtype=jnp.float32)
    w2, _ = init_conv1d_params(k_p2, C_in2, C_out2, K2)
    y2 = conv1d_synapse_conn_forward(x2, w2, None, stride=2, padding=3,
                                     dilation=2)
    y2 = jax.block_until_ready(y2)
    y2_ref = _reference_conv1d(x2, w2, None, stride=2, padding=3, dilation=2)
    assert y2.shape == y2_ref.shape, (y2.shape, y2_ref.shape)
    assert jnp.allclose(y2, y2_ref, atol=1e-5, rtol=1e-5), "test2 mismatch"

    # --- Test 3: multi-step mode + ragged L tiling (tile_l=128) --------------
    T, N3, C_in3, C_out3, L3, K3 = 2, 1, 4, 6, 300, 3
    x3 = jax.random.normal(k_x3, (T, N3, C_in3, L3), dtype=jnp.float32)
    w3, b3 = init_conv1d_params(k_p3, C_in3, C_out3, K3)
    y3 = conv1d_synapse_conn_forward_multi_step(
        x3, w3, b3, stride=1, padding=1, dilation=1, tile_l=128)
    y3 = jax.block_until_ready(y3)
    y3_ref = jnp.stack([
        _reference_conv1d(x3[t], w3, b3, stride=1, padding=1, dilation=1)
        for t in range(T)])
    assert y3.shape == y3_ref.shape, (y3.shape, y3_ref.shape)
    assert jnp.allclose(y3, y3_ref, atol=1e-5, rtol=1e-5), "test3 mismatch"

    print("KERNEL_OK")
</pallas_src>

<mosaic_0001>
module attributes {stable_mosaic.version = 11 : i64} {
  func.func @_conv1d_im2col_kernel(%arg0: i32, %arg1: i32, %arg2: memref<1x12x16xf32, #tpu.memory_space<vmem>>, %arg3: memref<8x12xf32, #tpu.memory_space<vmem>>, %arg4: memref<8x1xf32, #tpu.memory_space<vmem>>, %arg5: memref<1x8x16xf32, #tpu.memory_space<vmem>>) attributes {dimension_semantics = [#tpu.dimension_semantics<parallel>, #tpu.dimension_semantics<parallel>], iteration_bounds = array<i64: 2, 1>, scalar_prefetch = 0 : i64, scratch_operands = 0 : i64, tpu.core_type = #tpu.core_type<tc>, window_params = [{transform_indices = @transform_0, window_bounds = array<i64: 1, 12, 16>}, {pipeline_mode = #tpu.pipeline_mode<synchronous>, transform_indices = @transform_1, window_bounds = array<i64: 8, 12>}, {pipeline_mode = #tpu.pipeline_mode<synchronous>, transform_indices = @transform_2, window_bounds = array<i64: 8, 1>}, {transform_indices = @transform_3, window_bounds = array<i64: 1, 8, 16>}]} {
    %c0 = arith.constant 0 : index
    %c0_0 = arith.constant 0 : index
    %0 = vector.load %arg3[%c0, %c0_0] : memref<8x12xf32, #tpu.memory_space<vmem>>, vector<8x12xf32>
    %c0_1 = arith.constant 0 : index
    %c0_2 = arith.constant 0 : index
    %c0_3 = arith.constant 0 : index
    %1 = vector.load %arg2[%c0_1, %c0_2, %c0_3] : memref<1x12x16xf32, #tpu.memory_space<vmem>>, vector<1x12x16xf32>
    %2 = vector.shape_cast %1 : vector<1x12x16xf32> to vector<12x16xf32>
    %cst = arith.constant dense<0.000000e+00> : vector<8x16xf32>
    %3 = tpu.matmul %0, %2, %cst {dimension_numbers = #tpu.dot_dimension_numbers<[1], [0], [0], [1], [0, 0, 1, 1], [], []>} : vector<8x12xf32>, vector<12x16xf32>, vector<8x16xf32> -> vector<8x16xf32>
    %c0_4 = arith.constant 0 : index
    %c0_5 = arith.constant 0 : index
    %4 = vector.load %arg4[%c0_4, %c0_5] : memref<8x1xf32, #tpu.memory_space<vmem>>, vector<8x1xf32>
    %5 = vector.broadcast %4 : vector<8x1xf32> to vector<8x16xf32>
    %6 = arith.addf %3, %5 : vector<8x16xf32>
    %c0_6 = arith.constant 0 : index
    %c0_7 = arith.constant 0 : index
    %c0_8 = arith.constant 0 : index
    %7 = vector.load %arg5[%c0_6, %c0_7, %c0_8] : memref<1x8x16xf32, #tpu.memory_space<vmem>>, vector<1x8x16xf32>
    %8 = vector.shape_cast %7 : vector<1x8x16xf32> to vector<8x16xf32>
    %9 = vector.shape_cast %6 : vector<8x16xf32> to vector<1x8x16xf32>
    tpu.vector_store %arg5[%c0_6, %c0_7, %c0_8], %9 {strides = array<i32>} : memref<1x8x16xf32, #tpu.memory_space<vmem>>, vector<1x8x16xf32>,
    return
  }
  func.func @transform_0(%arg0: i32, %arg1: i32) -> (i32, i32, i32) {
    %c0_i32 = arith.constant 0 : i32
    %c0_i32_0 = arith.constant 0 : i32
    return %arg0, %c0_i32, %arg1 : i32, i32, i32
  }
  func.func @transform_1(%arg0: i32, %arg1: i32) -> (i32, i32) {
    %c0_i32 = arith.constant 0 : i32
    %c0_i32_0 = arith.constant 0 : i32
    %c0_i32_1 = arith.constant 0 : i32
    return %c0_i32, %c0_i32_0 : i32, i32
  }
  func.func @transform_2(%arg0: i32, %arg1: i32) -> (i32, i32) {
    %c0_i32 = arith.constant 0 : i32
    %c0_i32_0 = arith.constant 0 : i32
    %c0_i32_1 = arith.constant 0 : i32
    return %c0_i32, %c0_i32_0 : i32, i32
  }
  func.func @transform_3(%arg0: i32, %arg1: i32) -> (i32, i32, i32) {
    %c0_i32 = arith.constant 0 : i32
    %c0_i32_0 = arith.constant 0 : i32
    return %arg0, %c0_i32, %arg1 : i32, i32, i32
  }
}

</mosaic_0001>

<llo_original>
// kernel: tpu_custom_call.1
$region0: #{tpu_custom_call.1}
  #allocation0 [shape = 'u32[]', space=smem, size = 0x4, offset = 0x4, fixed_abs, tag = 'smem constant byte address 0x4 - core index']
  #allocation1 [shape = 'u32[72,128]{1,0:T(1,128)}', space=vmem, size = 0x9000, scoped, tag = 'internal scratch']
  %s0 = inlined_call_operand.vmem [shape: f32[2,12,16], index: 0, kind: input, shape index: {}]
  %s1 = inlined_call_operand.vmem [shape: f32[8,12], index: 1, kind: input, shape index: {}]
  %s2 = inlined_call_operand.vmem [shape: f32[8,1], index: 2, kind: input, shape index: {}]
  %s3 = inlined_call_operand.hbm [shape: f32[2,8,16], index: 3, kind: output, shape index: {}]
  %s4 = sld [smem:[#allocation0]]
  $region45: #{tpu_custom_call.1} parent=0
    _
  %s6 = ssub.s32 1, %s4
  %s7 = scalar_select 0, %s6, %s4
  $region1: #{tpu_custom_call.1} parent=0
    #allocation2 [shape = 'u8[8192]{0}', space=vmem, size = 0x2000, scoped, tag = 'output window, operand 0']
    #allocation3 [shape = 's32[2]{0}', space=sflag, size = 0x8, scoped, tag = 'scoped memory for tpu_custom_call.1']
    %8 = vsyncpa [#allocation3], 0
    %s9 = scalar_lea.sflag [#allocation3], 1
    %10 = vsyncpa %s9, 0
    loop: start=0, step=1, limit=4
    $region2: #{tpu_custom_call.1} parent=1 // loop_pre_header
      _
    $region3: #{tpu_custom_call.1} parent=1 // loop_header
      %s12 = sphi 0, %s16
      %p13 = scmp.ge.s32.totalorder %s12, 4
      %s19 = sphi 0, %s31
      %s20 = sphi 0, %s27
      %s21 = sphi 0, %s19
      %s22 = sphi 0, %s20
      %s23 = sphi 0, %s21
      %s24 = sphi 0, %s22
      %s36 = sphi 0, %s38
      %s39 = sphi 0, %s36
      %s40 = sphi 0, %s39
      %s56 = sphi 0, %s40
      %s60 = sphi 0, %s60
      %s62 = sphi 0, %s60
      %s63 = sphi 0, %s62
      %s77 = sphi 0, %s63
      %s81 = sphi 0, %s81
      %s83 = sphi 0, %s81
      %s84 = sphi 0, %s83
      %s98 = sphi 0, %s84
      %s106 = sphi 0, %s108
      %s109 = sphi 0, %s106
      %s110 = sphi 0, %s109
      %s126 = sphi 0, %s110
    $region4: #{tpu_custom_call.1} parent=1 // loop_header_branch
      %15 = sbr.rel (%p13) target = $region8
    $region5: #{tpu_custom_call.1} parent=1 // loop_body
      %s17 = ssub.s32 %s12, 1
      %s18 = ssub.s32 %s12, 2
      %s25 = sadd.s32 1, %s20
      %p26 = scmp.ge.s32.totalorder %s25, 1
      %s27 = scalar_select %p26, 0, %s25
      %s28 = sadd.s32 1, %s19
      %s29 = scalar_select %p26, %s28, %s19
      %p30 = scmp.ge.s32.totalorder %s29, 2
      %s31 = scalar_select %p30, 0, %s29
      %s32 = ssub.s32 %s19, %s31
      %s33 = ssub.s32 %s20, %s27
      %s34 = sor.u32 %s32, %s33
      %p35 = scmp.eq.s32.totalorder %s34, 0
      %s37 = sadd.s32 %s36, 1
      %s38 = scalar_select %p35, %s36, %s37
      %p41 = pneg %p35
      %p42 = scmp.eq.s32.totalorder %s12, 1
      %p43 = por %p41, %p42
      %p44 = scmp.ne.s32.totalorder %s36, %s39
      %p45 = scmp.eq.s32.totalorder %s12, 0
      %p46 = por %p44, %p45
      %p47 = scmp.ne.s32.totalorder %s36, %s39
      %p48 = scmp.eq.s32.totalorder %s17, 1
      %p49 = por %p47, %p48
      %p50 = scmp.ne.s32.totalorder %s39, %s40
      %p51 = scmp.eq.s32.totalorder %s17, 0
      %p52 = por %p50, %p51
      %p53 = scmp.ne.s32.totalorder %s39, %s40
      %p54 = scmp.eq.s32.totalorder %s18, 1
      %p55 = por %p53, %p54
      %p57 = scmp.ne.s32.totalorder %s40, %s56
      %p58 = scmp.eq.s32.totalorder %s18, 0
      %p59 = por %p57, %p58
      %s61 = sadd.s32 %s60, 1
      %p64 = scmp.eq.s32.totalorder %s12, 1
      %p65 = scmp.ne.s32.totalorder %s60, %s62
      %p66 = scmp.eq.s32.totalorder %s12, 0
      %p67 = por %p65, %p66
      %p68 = scmp.ne.s32.totalorder %s60, %s62
      %p69 = scmp.eq.s32.totalorder %s17, 1
      %p70 = por %p68, %p69
      %p71 = scmp.ne.s32.totalorder %s62, %s63
      %p72 = scmp.eq.s32.totalorder %s17, 0
      %p73 = por %p71, %p72
      %p74 = scmp.ne.s32.totalorder %s62, %s63
      %p75 = scmp.eq.s32.totalorder %s18, 1
      %p76 = por %p74, %p75
      %p78 = scmp.ne.s32.totalorder %s63, %s77
      %p79 = scmp.eq.s32.totalorder %s18, 0
      %p80 = por %p78, %p79
      %s82 = sadd.s32 %s81, 1
      %p85 = scmp.eq.s32.totalorder %s12, 1
      %p86 = scmp.ne.s32.totalorder %s81, %s83
      %p87 = scmp.eq.s32.totalorder %s12, 0
      %p88 = por %p86, %p87
      %p89 = scmp.ne.s32.totalorder %s81, %s83
      %p90 = scmp.eq.s32.totalorder %s17, 1
      %p91 = por %p89, %p90
      %p92 = scmp.ne.s32.totalorder %s83, %s84
      %p93 = scmp.eq.s32.totalorder %s17, 0
      %p94 = por %p92, %p93
      %p95 = scmp.ne.s32.totalorder %s83, %s84
      %p96 = scmp.eq.s32.totalorder %s18, 1
      %p97 = por %p95, %p96
      %p99 = scmp.ne.s32.totalorder %s84, %s98
      %p100 = scmp.eq.s32.totalorder %s18, 0
      %p101 = por %p99, %p100
      %s102 = ssub.s32 %s19, %s31
      %s103 = ssub.s32 %s20, %s27
      %s104 = sor.u32 %s102, %s103
      %p105 = scmp.eq.s32.totalorder %s104, 0
      %s107 = sadd.s32 %s106, 1
      %s108 = scalar_select %p105, %s106, %s107
      %p111 = pneg %p105
      %p112 = scmp.eq.s32.totalorder %s12, 1
      %p113 = por %p111, %p112
      %p114 = scmp.ne.s32.totalorder %s106, %s109
      %p115 = scmp.eq.s32.totalorder %s12, 0
      %p116 = por %p114, %p115
      %p117 = scmp.ne.s32.totalorder %s106, %s109
      %p118 = scmp.eq.s32.totalorder %s17, 1
      %p119 = por %p117, %p118
      %p120 = scmp.ne.s32.totalorder %s109, %s110
      %p121 = scmp.eq.s32.totalorder %s17, 0
      %p122 = por %p120, %p121
      %p123 = scmp.ne.s32.totalorder %s109, %s110
      %p124 = scmp.eq.s32.totalorder %s18, 1
      %p125 = por %p123, %p124
      %p127 = scmp.ne.s32.totalorder %s110, %s126
      %p128 = scmp.eq.s32.totalorder %s18, 0
      %p129 = por %p127, %p128
      %p130 = scmp.le.s32.totalorder 1, %s12
      %p131 = scmp.lt.s32.totalorder %s12, 3
      %p132 = pnand %p130, %p131
      %p133 = pneg %p132
      // Predicated region
      $region9: #{tpu_custom_call.1} parent=5 // pred_check
        _
      $region10: #{tpu_custom_call.1} parent=5 // pred_check_branch
        %135 = sbr.rel (%p132) target = $region12
      $region11: #{tpu_custom_call.1} parent=5 // pred_region
        %s136 = ssub.s32 %s12, 1
        // Predicated region
        $region13: #{tpu_custom_call.1} parent=11 // pred_check
          %p137 = pneg %p73
        $region14: #{tpu_custom_call.1} parent=11 // pred_check_branch
          %139 = sbr.rel (%p137) target = $region16
        $region15: #{tpu_custom_call.1} parent=11 // pred_region
          _
        $region16: #{tpu_custom_call.1} parent=11 // pred_fallthru
          _
        // Predicated region
        $region17: #{tpu_custom_call.1} parent=11 // pred_check
          %p140 = pneg %p94
        $region18: #{tpu_custom_call.1} parent=11 // pred_check_branch
          %142 = sbr.rel (%p140) target = $region20
        $region19: #{tpu_custom_call.1} parent=11 // pred_region
          _
        $region20: #{tpu_custom_call.1} parent=11 // pred_fallthru
          _
      $region12: #{tpu_custom_call.1} parent=5 // pred_fallthru
        _
      %p143 = scmp.lt.s32.totalorder %s12, 2
      // Predicated region
      $region21: #{tpu_custom_call.1} parent=5 // pred_check
        %p144 = pneg %p143
      $region22: #{tpu_custom_call.1} parent=5 // pred_check_branch
        %146 = sbr.rel (%p144) target = $region24
      $region23: #{tpu_custom_call.1} parent=5 // pred_region
        // Predicated region
        $region25: #{tpu_custom_call.1} parent=23 // pred_check
          %p147 = pneg %p46
        $region26: #{tpu_custom_call.1} parent=23 // pred_check_branch
          %149 = sbr.rel (%p147) target = $region28
        $region27: #{tpu_custom_call.1} parent=23 // pred_region
          %p150 = scmp.lt.s32.totalorder %s19, 1
          %s151 = scalar_select %p150, %s19, 1
          %p152 = scmp.lt.s32.totalorder %s20, 0
          %s153 = scalar_select %p152, %s20, 0
          %s154 = smul.addr %s151, 2
          %s155 = sadd.s32 %s153, %s154
          %s156 = smul.addr %s155, 8
          %s157 = scalar_lea.vmem %s0, %s156
        $region28: #{tpu_custom_call.1} parent=23 // pred_fallthru
          _
      $region24: #{tpu_custom_call.1} parent=5 // pred_fallthru
        _
      %p158 = scmp.le.s32.totalorder 1, %s12
      %p159 = scmp.lt.s32.totalorder %s12, 3
      %p160 = pnand %p158, %p159
      %p161 = pneg %p160
      // Predicated region
      $region29: #{tpu_custom_call.1} parent=5 // pred_check
        _
      $region30: #{tpu_custom_call.1} parent=5 // pred_check_branch
        %163 = sbr.rel (%p160) target = $region32
      $region31: #{tpu_custom_call.1} parent=5 // pred_region
        %s164 = ssub.s32 %s12, 1
        %p165 = scmp.lt.s32.totalorder %s21, 1
        %s166 = scalar_select %p165, %s21, 1
        %p167 = scmp.lt.s32.totalorder %s22, 0
        %s168 = scalar_select %p167, %s22, 0
        %s169 = smul.addr %s166, 2
        %s170 = sadd.s32 %s168, %s169
        %s171 = smul.addr %s170, 8
        %s172 = scalar_lea.vmem %s0, %s171
        %p173 = pneg %p52
        %p174 = pneg %p49
        %p175 = pneg %p73
        %p176 = pneg %p70
        %p177 = pneg %p94
        %p178 = pneg %p91
        %p179 = pneg %p122
        %p180 = pneg %p119
        %s181 = sand.u32 %s109, 1
        %s182 = scalar_lea.sflag [#allocation3], %s181
        %s183 = sand.u32 %s109, 1
        %s184 = smul.addr %s183, 8
        %s185 = scalar_lea.vmem [#allocation2], %s184
        %p186 = scmp.lt.s32.totalorder %s21, 1
        %s187 = scalar_select %p186, %s21, 1
        %p188 = scmp.lt.s32.totalorder %s22, 0
        %s189 = scalar_select %p188, %s22, 0
        %s190 = smul.addr %s187, 2
        %s191 = sadd.s32 %s189, %s190
        %s192 = smul.addr %s191, 8
        %s193 = scalar_lea.vmem %s0, %s192
        %v194 = vld [vmem:[%s1] sm:$0xff]
        %v195 = vld [vmem:[%s193] sm:$0xff]
        %v196 = vld [vmem:[%s193 + $0x8] sm:$0xf]
        %v197 = vld [vmem:[%s2] sm:$0xff]
        %199 = vset.pattern.permute.xlu0 0
        %200 = vperm.xlu0 %199, %v197
        %v201 = vpop.permute.xlu0 %200
        %vm203 = vcmask 97280
        %v205 = vsel %vm203, %v194, 0
        %vm207 = vcmask 1043456
        %v209 = vsel %vm207, %v196, 0
        %211 = vmatpush.msra.mxu0 0.0
        %212 = vmatpush.msra.mxu0 0.0
        %213 = vmatpush.msra.mxu0 0.0
        %214 = vmatpush.msra.mxu0 0.0
        %215 = vmatpush.msra.mxu0 0.0
        %216 = vmatpush.msra.mxu0 0.0
        %217 = vmatpush.msra.mxu0 0.0
        %218 = vmatpush.msra.mxu0 0.0
        %219 = vmatpush.msra.mxu0 0.0
        %220 = vmatpush.msra.mxu0 0.0
        %221 = vmatpush.msra.mxu0 0.0
        %222 = vmatpush.msra.mxu0 0.0
        %223 = vmatpush.msra.mxu0 0.0
        %224 = vmatpush.msra.mxu0 0.0
        %225 = vmatpush.msra.mxu0 %v209
        %226 = vmatpush.msra.mxu0 %v195
        %227 = vmatmul.f32.gmra.mxu0 %v205
        %v228 = vpop.f32.mrf.mxu0
        %v229 = vadd.f32 %v201, %v228
        %230 = vdwg.mxu0
        %vm231 = vcmask 130048
        %232 = vst.msk [vmem:[%s185] sm:$0xff] %vm231, %v229
        %s233 = sand.u32 %s109, 1
        %s234 = scalar_lea.sflag [#allocation3], %s233
        %s235 = sand.u32 %s109, 1
        %s236 = smul.addr %s235, 8
        %s237 = scalar_lea.vmem [#allocation2], %s236
        // Predicated region
        $region33: #{tpu_custom_call.1} parent=31 // pred_check
          %p238 = pneg %p119
        $region34: #{tpu_custom_call.1} parent=31 // pred_check_branch
          %240 = sbr.rel (%p238) target = $region36
        $region35: #{tpu_custom_call.1} parent=31 // pred_region
          %242 = vsyncadd %s234, 0
          %s243 = sadd.s32 %s22, %s21
          %s244 = smul.addr %s243, 8
          %s245 = scalar_lea.hbm %s3, %s244
          %s247 = sshll.u32 %s237, 4
          %s248 = int_to_ptr.vmem [resolvable:$true] %s247
          %s249 = sshll.u32 %s245, 4
          %s250 = int_to_ptr.hbm [resolvable:$true] %s249
          %252 = dma.vmem_to_hbm [thread:$0]  %s248, 128, %s250, %s234
        $region36: #{tpu_custom_call.1} parent=31 // pred_fallthru
          _
      $region32: #{tpu_custom_call.1} parent=5 // pred_fallthru
        _
      %p253 = scmp.le.s32.totalorder 2, %s12
      // Predicated region
      $region37: #{tpu_custom_call.1} parent=5 // pred_check
        %p254 = pneg %p253
      $region38: #{tpu_custom_call.1} parent=5 // pred_check_branch
        %256 = sbr.rel (%p254) target = $region40
      $region39: #{tpu_custom_call.1} parent=5 // pred_region
        %s257 = ssub.s32 %s12, 2
        // Predicated region
        $region41: #{tpu_custom_call.1} parent=39 // pred_check
          %p258 = pneg %p125
        $region42: #{tpu_custom_call.1} parent=39 // pred_check_branch
          %260 = sbr.rel (%p258) target = $region44
        $region43: #{tpu_custom_call.1} parent=39 // pred_region
          %s261 = sand.u32 %s110, 1
          %s262 = scalar_lea.sflag [#allocation3], %s261
          %s263 = sand.u32 %s110, 1
          %s264 = smul.addr %s263, 8
          %s265 = scalar_lea.vmem [#allocation2], %s264
          %267 = dma.done %s262, 128
        $region44: #{tpu_custom_call.1} parent=39 // pred_fallthru
          _
      $region40: #{tpu_custom_call.1} parent=5 // pred_fallthru
        _
    $region6: #{tpu_custom_call.1} parent=1 // loop_footer
      %s16 = sadd.s32 1, %s12
    $region7: #{tpu_custom_call.1} parent=1 // loop_footer_branch
      %11 = sbr.rel target = $region3
    $region8: #{tpu_custom_call.1} parent=1 // loop_exit
      _
    %268 = vsyncpa [#allocation3], 1
    %s269 = scalar_lea.sflag [#allocation3], 1
    %270 = vsyncpa %s269, 1

</llo_original>
